<compile_context>
chip_gen: v6e
topology: v6e:2x2x1
jax: 0.10.0
libtpu: 0.0.40
codegen_flags: <defaults>
</compile_context>

<pallas_src>
import math
import numpy as np
import jax
import jax.numpy as jnp
from jax import lax
from jax.experimental import pallas as pl
from jax.experimental.pallas import tpu as pltpu


# ----------------------------- Pallas kernel ---------------------------------
def _mxu_cumsum(x, tri):
    """Inclusive prefix sum along the lane (last) axis on the MXU.

    cs[:, j] = sum_{k<=j} x[:, k]  ==  x @ triu(ones)   (tri is upper-triangular incl. diag).
    The operand is split into bf16 hi/lo parts so the bf16 MXU path keeps ~f32 accuracy
    (tri is exact 0/1 in bf16); accumulation is in f32.
    """
    hi = x.astype(jnp.bfloat16)
    lo = (x - hi.astype(jnp.float32)).astype(jnp.bfloat16)
    return (jnp.dot(hi, tri, preferred_element_type=jnp.float32)
            + jnp.dot(lo, tri, preferred_element_type=jnp.float32))


def crm_kernel(times_ref, dt_ref, inj_ref, dp_ref, par_ref, tri_ref, out_ref,
               c_inj_ref, c_dp_ref, c_a_ref):
    t_idx = pl.program_id(1)

    # New wells block -> reset the time-axis carries.
    @pl.when(t_idx == 0)
    def _():
        c_inj_ref[...] = jnp.zeros_like(c_inj_ref)
        c_dp_ref[...] = jnp.zeros_like(c_dp_ref)
        c_a_ref[...] = jnp.zeros_like(c_a_ref)

    times = times_ref[...]        # (1, TK)
    dt    = dt_ref[...]           # (1, TK)   dt[:, j] = t[j]-t[j-1]; global col 0 / pad = 0
    inj   = inj_ref[...]          # (1, TK)
    dp_s  = dp_ref[...]           # (TM, TK)  dp shifted right by one column, col 0 = 0
    par   = par_ref[...]          # (TM, 128) packed [1/tau, J, f/tau, q0, 0, ...]
    tri   = tri_ref[...]          # (TK, TK)  bf16 upper-triangular ones (incl. diagonal)
    inv_tau    = par[:, 0:1]
    J          = par[:, 1:2]
    f_over_tau = par[:, 2:3]
    q0         = par[:, 3:4]

    x = times * inv_tau           # (TM, TK) broadcast
    nexp = jnp.exp(-x)
    pexp = jnp.exp(x)

    # Inclusive prefix sums on the MXU + cross-tile carries.
    cs_inj = _mxu_cumsum(pexp * inj, tri) + c_inj_ref[...]
    cs_dp  = _mxu_cumsum(pexp * dp_s, tri) + c_dp_ref[...]

    # Term 1: A[:, j-1] * (t[j]-t[j-1])   (global col 0 contributes 0 because dt[0] = 0).
    A = f_over_tau * nexp * cs_inj
    TM, TK = x.shape
    col = lax.broadcasted_iota(jnp.int32, (TM, TK), 1)
    A_shift = pltpu.roll(A, shift=1, axis=1)
    A_shift = jnp.where(col == 0, c_a_ref[...], A_shift)   # carry across tile boundary

    # Fused epilogue: q0*nexp - J*nexp*cs_dp + A_shift*dt  ->  nexp*(q0 - J*cs_dp) + A_shift*dt
    out_ref[...] = nexp * (q0 - J * cs_dp) + A_shift * dt

    # Update carries for the next time tile of this wells block.
    c_inj_ref[...] = cs_inj[:, -1:]
    c_dp_ref[...]  = cs_dp[:, -1:]
    c_a_ref[...]   = A[:, -1:]


# ------------------------------- wrapper --------------------------------------
def _ceil_to(a, m):
    return ((a + m - 1) // m) * m


def crm_forward(times, dp, inj, tau, J, f, q0, *, time_tile=1024):
    """times (1,T), dp (N,T-1), inj (1,T), tau/J/f/q0 (N,1) -> rates (N,T)."""
    f32 = jnp.float32
    times = times.astype(f32); inj = inj.astype(f32); dp = dp.astype(f32)
    tau = tau.astype(f32); J = J.astype(f32); f = f.astype(f32); q0 = q0.astype(f32)

    N = tau.shape[0]
    T = times.shape[1]

    # Wells tiling: aim for >= 2 wells blocks (without padding extra rows) so the
    # "parallel" wells grid axis can use both TensorCores on v7x.
    Np = _ceil_to(max(N, 8), 8)
    if Np <= 128:
        TM = max(8, _ceil_to((Np + 1) // 2, 8))
    else:
        TM = 128
    Np = _ceil_to(Np, TM)

    # Time tiling: TK multiple of 128, capped at 1024 so the (TK, TK) triangular
    # constant (bf16) stays <= 2 MiB and comfortably inside VMEM on all generations.
    Tp = _ceil_to(max(T, 128), 128)
    TK = min(_ceil_to(time_tile, 128), 1024, Tp)
    Tp = _ceil_to(Tp, TK)

    times_p = jnp.zeros((1, Tp), f32).at[:, :T].set(times)
    inj_p   = jnp.zeros((1, Tp), f32).at[:, :T].set(inj)
    dt_p    = jnp.zeros((1, Tp), f32).at[:, 1:T].set(jnp.diff(times, axis=1))
    # dp shifted right by one column so the in-kernel cumsum aligns with cumsum(pexp[:,1:]*dp).
    dp_p    = jnp.zeros((Np, Tp), f32).at[:N, 1:T].set(dp)

    # Packed per-well parameters: lanes [0..3] = [1/tau, J, f/tau, q0].
    # Padded wells get inv_tau = 0 -> exp(0) everywhere (no overflow in dead rows).
    params = jnp.zeros((Np, 128), f32)
    params = params.at[:N, 0].set(1.0 / tau[:, 0])
    params = params.at[:N, 1].set(J[:, 0])
    params = params.at[:N, 2].set(f[:, 0] / tau[:, 0])
    params = params.at[:N, 3].set(q0[:, 0])

    # Constant upper-triangular (incl. diagonal) 0/1 matrix for the MXU prefix sum.
    tri = jnp.triu(jnp.ones((TK, TK), f32)).astype(jnp.bfloat16)

    grid = (Np // TM, Tp // TK)

    grid_spec = pltpu.PrefetchScalarGridSpec(
        num_scalar_prefetch=0,
        grid=grid,
        in_specs=[
            pl.BlockSpec((1, TK), lambda w, t: (0, t)),      # times
            pl.BlockSpec((1, TK), lambda w, t: (0, t)),      # dt
            pl.BlockSpec((1, TK), lambda w, t: (0, t)),      # inj
            pl.BlockSpec((TM, TK), lambda w, t: (w, t)),     # dp (shifted)
            pl.BlockSpec((TM, 128), lambda w, t: (w, 0)),    # packed params
            pl.BlockSpec((TK, TK), lambda w, t: (0, 0)),     # triangular constant
        ],
        out_specs=pl.BlockSpec((TM, TK), lambda w, t: (w, t)),
        scratch_shapes=[pltpu.VMEM((TM, 1), f32),            # carry: cumsum(pexp*inj)
                        pltpu.VMEM((TM, 1), f32),            # carry: cumsum(pexp*dp_s)
                        pltpu.VMEM((TM, 1), f32)],           # carry: last A (term-1 shift)
    )

    cost = pl.CostEstimate(
        flops=int(Np * Tp * (8 * TK + 20)),
        transcendentals=int(2 * Np * Tp),
        bytes_accessed=int(4 * (2 * Np * Tp + 3 * Tp + 128 * Np) + 2 * TK * TK),
    )

    out = pl.pallas_call(
        crm_kernel,
        out_shape=jax.ShapeDtypeStruct((Np, Tp), f32),
        grid_spec=grid_spec,
        compiler_params=pltpu.CompilerParams(
            dimension_semantics=("parallel", "arbitrary"),
            vmem_limit_bytes=32 * 1024 * 1024,               # headroom for TK=1024 tiles
        ),
        cost_estimate=cost,
    )(times_p, dt_p, inj_p, dp_p, params, tri)
    return out[:N, :T]


# --------------------------- pure-JAX reference --------------------------------
def calc_rate_ref(times, dp, inj, tau, J, f, q0):
    nexp = jnp.exp(-times / tau)
    pexp = jnp.exp(times / tau)
    rates = q0 * nexp
    term1 = (f / tau * nexp * jnp.cumsum(pexp * inj, axis=1))[:, :-1] * jnp.diff(times, axis=1)
    term2 = -J * nexp[:, 1:] * jnp.cumsum(pexp[:, 1:] * dp, axis=1)
    return rates.at[:, 1:].add(term1 + term2)


# ------------------- SpatialCRM parameter heads (plain-JAX glue) ----------------
def _init_linear(key, n_in, n_out):
    k1, k2 = jax.random.split(key)
    bound = 1.0 / math.sqrt(n_in)
    W = jax.random.uniform(k1, (n_in, n_out), jnp.float32, -bound, bound)
    b = jax.random.uniform(k2, (n_out,), jnp.float32, -bound, bound)
    return W, b


def _field(locs, p1, p2, min_val):
    """Linear(2,h) -> ELU -> Linear(h,1) -> Softplus, plus minimum offset (tau/J/f heads)."""
    (W1, b1), (W2, b2) = p1, p2
    hidden = jax.nn.elu(locs @ W1 + b1)
    return min_val + jax.nn.softplus(hidden @ W2 + b2)   # (N, 1)


if __name__ == "__main__":
    f32 = jnp.float32
    hdim = 4
    tau_min, J_min, f_min = 1e-3, 0.0, 1e-3

    key = jax.random.PRNGKey(0)
    keys = jax.random.split(key, 16)

    # Spatial parameter heads (tiny MLPs; computed as plain JAX glue).
    tau_p1 = _init_linear(keys[0], 2, hdim); tau_p2 = _init_linear(keys[1], hdim, 1)
    J_p1   = _init_linear(keys[2], 2, hdim); J_p2   = _init_linear(keys[3], hdim, 1)
    f_p1   = _init_linear(keys[4], 2, hdim); f_p2   = _init_linear(keys[5], hdim, 1)

    # --- test 1: small single-tile case ---------------------------------------
    n_wells, n_steps = 4, 16
    locs  = jax.random.uniform(keys[6], (n_wells, 2), f32)
    times = (jnp.arange(n_steps, dtype=f32) * 0.3).reshape(1, n_steps)        # (1, T)
    inj   = 1.0 + jax.random.uniform(keys[7], (1, n_steps), f32)              # (1, T)
    dp    = 0.1 * jax.random.normal(keys[8], (n_wells, n_steps - 1), f32)     # (N, T-1)
    q0    = 1.0 + jax.random.uniform(keys[9], (n_wells, 1), f32)              # (N, 1)

    tau = _field(locs, tau_p1, tau_p2, tau_min)
    J   = _field(locs, J_p1, J_p2, J_min)
    f   = _field(locs, f_p1, f_p2, f_min)

    out = jax.block_until_ready(crm_forward(times, dp, inj, tau, J, f, q0))
    ref = calc_rate_ref(times, dp, inj, tau, J, f, q0)
    assert out.shape == (n_wells, n_steps)
    np.testing.assert_allclose(np.asarray(out), np.asarray(ref), rtol=3e-3, atol=1e-3)

    # --- test 2: multi-tile case (T > TK, N > TM) ------------------------------
    # Exercises the cross-time-tile carries, the t_idx==0 reset and >1 wells block.
    n_wells, n_steps = 20, 300
    locs  = jax.random.uniform(keys[10], (n_wells, 2), f32)
    times = (jnp.arange(n_steps, dtype=f32) * 0.01).reshape(1, n_steps)
    inj   = 1.0 + jax.random.uniform(keys[11], (1, n_steps), f32)
    dp    = 0.1 * jax.random.normal(keys[12], (n_wells, n_steps - 1), f32)
    q0    = 1.0 + jax.random.uniform(keys[13], (n_wells, 1), f32)

    tau = _field(locs, tau_p1, tau_p2, tau_min)
    J   = _field(locs, J_p1, J_p2, J_min)
    f   = _field(locs, f_p1, f_p2, f_min)

    out2 = jax.block_until_ready(
        crm_forward(times, dp, inj, tau, J, f, q0, time_tile=128))  # force multiple time tiles
    ref2 = calc_rate_ref(times, dp, inj, tau, J, f, q0)
    assert out2.shape == (n_wells, n_steps)
    np.testing.assert_allclose(np.asarray(out2), np.asarray(ref2), rtol=3e-3, atol=1e-3)

    print("KERNEL_OK")
</pallas_src>

<mosaic_0001>
module attributes {stable_mosaic.version = 11 : i64} {
  func.func @crm_kernel(%arg0: i32, %arg1: i32, %arg2: memref<1x128xf32, #tpu.memory_space<vmem>>, %arg3: memref<1x128xf32, #tpu.memory_space<vmem>>, %arg4: memref<1x128xf32, #tpu.memory_space<vmem>>, %arg5: memref<8x128xf32, #tpu.memory_space<vmem>>, %arg6: memref<8x128xf32, #tpu.memory_space<vmem>>, %arg7: memref<128x128xbf16, #tpu.memory_space<vmem>>, %arg8: memref<8x128xf32, #tpu.memory_space<vmem>>, %arg9: memref<8x1xf32, #tpu.memory_space<vmem>>, %arg10: memref<8x1xf32, #tpu.memory_space<vmem>>, %arg11: memref<8x1xf32, #tpu.memory_space<vmem>>) attributes {dimension_semantics = [#tpu.dimension_semantics<parallel>, #tpu.dimension_semantics<arbitrary>], iteration_bounds = array<i64: 1, 1>, scalar_prefetch = 0 : i64, scratch_operands = 3 : i64, tpu.core_type = #tpu.core_type<tc>, window_params = [{transform_indices = @transform_0, window_bounds = array<i64: 1, 128>}, {transform_indices = @transform_1, window_bounds = array<i64: 1, 128>}, {transform_indices = @transform_2, window_bounds = array<i64: 1, 128>}, {transform_indices = @transform_3, window_bounds = array<i64: 8, 128>}, {transform_indices = @transform_4, window_bounds = array<i64: 8, 128>}, {pipeline_mode = #tpu.pipeline_mode<synchronous>, transform_indices = @transform_5, window_bounds = array<i64: 128, 128>}, {transform_indices = @transform_6, window_bounds = array<i64: 8, 128>}]} {
    %c0_i32 = arith.constant 0 : i32
    %0 = arith.cmpi eq, %arg1, %c0_i32 : i32
    %1 = arith.extui %0 : i1 to i32
    %c0_i32_0 = arith.constant 0 : i32
    %2 = arith.cmpi ne, %1, %c0_i32_0 : i32
    scf.if %2 {
      %cst_31 = arith.constant 0.000000e+00 : f32
      %69 = vector.broadcast %cst_31 : f32 to vector<8x1xf32>
      %c0_32 = arith.constant 0 : index
      %c0_33 = arith.constant 0 : index
      %70 = vector.load %arg9[%c0_32, %c0_33] : memref<8x1xf32, #tpu.memory_space<vmem>>, vector<8x1xf32>
      tpu.vector_store %arg9[%c0_32, %c0_33], %69 {strides = array<i32>} : memref<8x1xf32, #tpu.memory_space<vmem>>, vector<8x1xf32>,
      %cst_34 = arith.constant 0.000000e+00 : f32
      %71 = vector.broadcast %cst_34 : f32 to vector<8x1xf32>
      %c0_35 = arith.constant 0 : index
      %c0_36 = arith.constant 0 : index
      %72 = vector.load %arg10[%c0_35, %c0_36] : memref<8x1xf32, #tpu.memory_space<vmem>>, vector<8x1xf32>
      tpu.vector_store %arg10[%c0_35, %c0_36], %71 {strides = array<i32>} : memref<8x1xf32, #tpu.memory_space<vmem>>, vector<8x1xf32>,
      %cst_37 = arith.constant 0.000000e+00 : f32
      %73 = vector.broadcast %cst_37 : f32 to vector<8x1xf32>
      %c0_38 = arith.constant 0 : index
      %c0_39 = arith.constant 0 : index
      %74 = vector.load %arg11[%c0_38, %c0_39] : memref<8x1xf32, #tpu.memory_space<vmem>>, vector<8x1xf32>
      tpu.vector_store %arg11[%c0_38, %c0_39], %73 {strides = array<i32>} : memref<8x1xf32, #tpu.memory_space<vmem>>, vector<8x1xf32>,
    } else {
    }
    %c0 = arith.constant 0 : index
    %c0_1 = arith.constant 0 : index
    %3 = vector.load %arg2[%c0, %c0_1] : memref<1x128xf32, #tpu.memory_space<vmem>>, vector<1x128xf32>
    %c0_2 = arith.constant 0 : index
    %c0_3 = arith.constant 0 : index
    %4 = vector.load %arg3[%c0_2, %c0_3] : memref<1x128xf32, #tpu.memory_space<vmem>>, vector<1x128xf32>
    %c0_4 = arith.constant 0 : index
    %c0_5 = arith.constant 0 : index
    %5 = vector.load %arg4[%c0_4, %c0_5] : memref<1x128xf32, #tpu.memory_space<vmem>>, vector<1x128xf32>
    %c0_6 = arith.constant 0 : index
    %c0_7 = arith.constant 0 : index
    %6 = vector.load %arg5[%c0_6, %c0_7] : memref<8x128xf32, #tpu.memory_space<vmem>>, vector<8x128xf32>
    %c0_8 = arith.constant 0 : index
    %c0_9 = arith.constant 0 : index
    %7 = vector.load %arg6[%c0_8, %c0_9] : memref<8x128xf32, #tpu.memory_space<vmem>>, vector<8x128xf32>
    %c0_10 = arith.constant 0 : index
    %c0_11 = arith.constant 0 : index
    %8 = vector.load %arg7[%c0_10, %c0_11] : memref<128x128xbf16, #tpu.memory_space<vmem>>, vector<128x128xbf16>
    %9 = vector.extract_strided_slice %7 {offsets = [0, 0], sizes = [8, 1], strides = [1, 1]} : vector<8x128xf32> to vector<8x1xf32>
    %10 = vector.extract_strided_slice %7 {offsets = [0, 1], sizes = [8, 1], strides = [1, 1]} : vector<8x128xf32> to vector<8x1xf32>
    %11 = vector.extract_strided_slice %7 {offsets = [0, 2], sizes = [8, 1], strides = [1, 1]} : vector<8x128xf32> to vector<8x1xf32>
    %12 = vector.extract_strided_slice %7 {offsets = [0, 3], sizes = [8, 1], strides = [1, 1]} : vector<8x128xf32> to vector<8x1xf32>
    %13 = vector.broadcast %3 : vector<1x128xf32> to vector<8x128xf32>
    %14 = vector.broadcast %9 : vector<8x1xf32> to vector<8x128xf32>
    %15 = arith.mulf %13, %14 : vector<8x128xf32>
    %cst = arith.constant 0.000000e+00 : f32
    %16 = vector.broadcast %cst : f32 to vector<8x128xf32>
    %17 = arith.subf %16, %15 : vector<8x128xf32>
    %18 = math.exp %17 : vector<8x128xf32>
    %19 = math.exp %15 : vector<8x128xf32>
    %20 = vector.broadcast %5 : vector<1x128xf32> to vector<8x128xf32>
    %21 = arith.mulf %19, %20 : vector<8x128xf32>
    %22 = arith.truncf %21 : vector<8x128xf32> to vector<8x128xbf16>
    %23 = arith.extf %22 : vector<8x128xbf16> to vector<8x128xf32>
    %24 = arith.subf %21, %23 : vector<8x128xf32>
    %25 = arith.truncf %24 : vector<8x128xf32> to vector<8x128xbf16>
    %cst_12 = arith.constant dense<0.000000e+00> : vector<8x128xf32>
    %26 = tpu.matmul %22, %8, %cst_12 {dimension_numbers = #tpu.dot_dimension_numbers<[1], [0], [0], [1], [0, 0, 1, 1], [], []>} : vector<8x128xbf16>, vector<128x128xbf16>, vector<8x128xf32> -> vector<8x128xf32>
    %cst_13 = arith.constant dense<0.000000e+00> : vector<8x128xf32>
    %27 = tpu.matmul %25, %8, %cst_13 {dimension_numbers = #tpu.dot_dimension_numbers<[1], [0], [0], [1], [0, 0, 1, 1], [], []>} : vector<8x128xbf16>, vector<128x128xbf16>, vector<8x128xf32> -> vector<8x128xf32>
    %28 = arith.addf %26, %27 : vector<8x128xf32>
    %c0_14 = arith.constant 0 : index
    %c0_15 = arith.constant 0 : index
    %29 = vector.load %arg9[%c0_14, %c0_15] : memref<8x1xf32, #tpu.memory_space<vmem>>, vector<8x1xf32>
    %30 = vector.broadcast %29 : vector<8x1xf32> to vector<8x128xf32>
    %31 = arith.addf %28, %30 : vector<8x128xf32>
    %32 = arith.mulf %19, %6 : vector<8x128xf32>
    %33 = arith.truncf %32 : vector<8x128xf32> to vector<8x128xbf16>
    %34 = arith.extf %33 : vector<8x128xbf16> to vector<8x128xf32>
    %35 = arith.subf %32, %34 : vector<8x128xf32>
    %36 = arith.truncf %35 : vector<8x128xf32> to vector<8x128xbf16>
    %cst_16 = arith.constant dense<0.000000e+00> : vector<8x128xf32>
    %37 = tpu.matmul %33, %8, %cst_16 {dimension_numbers = #tpu.dot_dimension_numbers<[1], [0], [0], [1], [0, 0, 1, 1], [], []>} : vector<8x128xbf16>, vector<128x128xbf16>, vector<8x128xf32> -> vector<8x128xf32>
    %cst_17 = arith.constant dense<0.000000e+00> : vector<8x128xf32>
    %38 = tpu.matmul %36, %8, %cst_17 {dimension_numbers = #tpu.dot_dimension_numbers<[1], [0], [0], [1], [0, 0, 1, 1], [], []>} : vector<8x128xbf16>, vector<128x128xbf16>, vector<8x128xf32> -> vector<8x128xf32>
    %39 = arith.addf %37, %38 : vector<8x128xf32>
    %c0_18 = arith.constant 0 : index
    %c0_19 = arith.constant 0 : index
    %40 = vector.load %arg10[%c0_18, %c0_19] : memref<8x1xf32, #tpu.memory_space<vmem>>, vector<8x1xf32>
    %41 = vector.broadcast %40 : vector<8x1xf32> to vector<8x128xf32>
    %42 = arith.addf %39, %41 : vector<8x128xf32>
    %43 = vector.broadcast %11 : vector<8x1xf32> to vector<8x128xf32>
    %44 = arith.mulf %43, %18 : vector<8x128xf32>
    %45 = arith.mulf %44, %31 : vector<8x128xf32>
    %46 = tpu.iota {dimensions = array<i32: 1>} : vector<8x128xi32>
    %c1_i32 = arith.constant 1 : i32
    %47 = tpu.dynamic_rotate %45 by %c1_i32 dim 1 : vector<8x128xf32>, i32 -> vector<8x128xf32>
    %c0_i32_20 = arith.constant 0 : i32
    %48 = vector.broadcast %c0_i32_20 : i32 to vector<8x128xi32>
    %49 = arith.cmpi eq, %46, %48 : vector<8x128xi32>
    %c0_21 = arith.constant 0 : index
    %c0_22 = arith.constant 0 : index
    %50 = vector.load %arg11[%c0_21, %c0_22] : memref<8x1xf32, #tpu.memory_space<vmem>>, vector<8x1xf32>
    %51 = vector.shape_cast %50 : vector<8x1xf32> to vector<8x1xf32>
    %52 = vector.broadcast %51 : vector<8x1xf32> to vector<8x128xf32>
    %53 = arith.select %49, %52, %47 : vector<8x128xi1>, vector<8x128xf32>
    %54 = vector.broadcast %10 : vector<8x1xf32> to vector<8x128xf32>
    %55 = arith.mulf %54, %42 : vector<8x128xf32>
    %56 = vector.broadcast %12 : vector<8x1xf32> to vector<8x128xf32>
    %57 = arith.subf %56, %55 : vector<8x128xf32>
    %58 = arith.mulf %18, %57 : vector<8x128xf32>
    %59 = vector.broadcast %4 : vector<1x128xf32> to vector<8x128xf32>
    %60 = arith.mulf %53, %59 : vector<8x128xf32>
    %61 = arith.addf %58, %60 : vector<8x128xf32>
    %c0_23 = arith.constant 0 : index
    %c0_24 = arith.constant 0 : index
    %62 = vector.load %arg8[%c0_23, %c0_24] : memref<8x128xf32, #tpu.memory_space<vmem>>, vector<8x128xf32>
    tpu.vector_store %arg8[%c0_23, %c0_24], %61 {strides = array<i32>} : memref<8x128xf32, #tpu.memory_space<vmem>>, vector<8x128xf32>,
    %63 = vector.extract_strided_slice %31 {offsets = [0, 127], sizes = [8, 1], strides = [1, 1]} : vector<8x128xf32> to vector<8x1xf32>
    %c0_25 = arith.constant 0 : index
    %c0_26 = arith.constant 0 : index
    %64 = vector.load %arg9[%c0_25, %c0_26] : memref<8x1xf32, #tpu.memory_space<vmem>>, vector<8x1xf32>
    tpu.vector_store %arg9[%c0_25, %c0_26], %63 {strides = array<i32>} : memref<8x1xf32, #tpu.memory_space<vmem>>, vector<8x1xf32>,
    %65 = vector.extract_strided_slice %42 {offsets = [0, 127], sizes = [8, 1], strides = [1, 1]} : vector<8x128xf32> to vector<8x1xf32>
    %c0_27 = arith.constant 0 : index
    %c0_28 = arith.constant 0 : index
    %66 = vector.load %arg10[%c0_27, %c0_28] : memref<8x1xf32, #tpu.memory_space<vmem>>, vector<8x1xf32>
    tpu.vector_store %arg10[%c0_27, %c0_28], %65 {strides = array<i32>} : memref<8x1xf32, #tpu.memory_space<vmem>>, vector<8x1xf32>,
    %67 = vector.extract_strided_slice %45 {offsets = [0, 127], sizes = [8, 1], strides = [1, 1]} : vector<8x128xf32> to vector<8x1xf32>
    %c0_29 = arith.constant 0 : index
    %c0_30 = arith.constant 0 : index
    %68 = vector.load %arg11[%c0_29, %c0_30] : memref<8x1xf32, #tpu.memory_space<vmem>>, vector<8x1xf32>
    tpu.vector_store %arg11[%c0_29, %c0_30], %67 {strides = array<i32>} : memref<8x1xf32, #tpu.memory_space<vmem>>, vector<8x1xf32>,
    return
  }
  func.func @transform_0(%arg0: i32, %arg1: i32) -> (i32, i32) {
    %c0_i32 = arith.constant 0 : i32
    %c0_i32_0 = arith.constant 0 : i32
    return %c0_i32, %arg1 : i32, i32
  }
  func.func @transform_1(%arg0: i32, %arg1: i32) -> (i32, i32) {
    %c0_i32 = arith.constant 0 : i32
    %c0_i32_0 = arith.constant 0 : i32
    return %c0_i32, %arg1 : i32, i32
  }
  func.func @transform_2(%arg0: i32, %arg1: i32) -> (i32, i32) {
    %c0_i32 = arith.constant 0 : i32
    %c0_i32_0 = arith.constant 0 : i32
    return %c0_i32, %arg1 : i32, i32
  }
  func.func @transform_3(%arg0: i32, %arg1: i32) -> (i32, i32) {
    %c0_i32 = arith.constant 0 : i32
    return %arg0, %arg1 : i32, i32
  }
  func.func @transform_4(%arg0: i32, %arg1: i32) -> (i32, i32) {
    %c0_i32 = arith.constant 0 : i32
    %c0_i32_0 = arith.constant 0 : i32
    return %arg0, %c0_i32 : i32, i32
  }
  func.func @transform_5(%arg0: i32, %arg1: i32) -> (i32, i32) {
    %c0_i32 = arith.constant 0 : i32
    %c0_i32_0 = arith.constant 0 : i32
    %c0_i32_1 = arith.constant 0 : i32
    return %c0_i32, %c0_i32_0 : i32, i32
  }
  func.func @transform_6(%arg0: i32, %arg1: i32) -> (i32, i32) {
    %c0_i32 = arith.constant 0 : i32
    return %arg0, %arg1 : i32, i32
  }
}

</mosaic_0001>

<llo_original>
// kernel: tpu_custom_call.1
$region0: #{tpu_custom_call.1}
  #allocation0 [shape = 'u32[]', space=smem, size = 0x4, offset = 0x4, fixed_abs, tag = 'smem constant byte address 0x4 - core index']
  #allocation1 [shape = 'u32[144,128]{1,0:T(1,128)}', space=vmem, size = 0x12000, scoped, tag = 'internal scratch']
  #allocation2 [shape = 'f32[8,1]{1,0:T(8,128)}', space=vmem, size = 0x1000, scoped, tag = 'scratch operand']
  #allocation3 [shape = 'f32[8,1]{1,0:T(8,128)}', space=vmem, size = 0x1000, scoped, tag = 'scratch operand']
  #allocation4 [shape = 'f32[8,1]{1,0:T(8,128)}', space=vmem, size = 0x1000, scoped, tag = 'scratch operand']
  %s0 = inlined_call_operand.hbm [shape: f32[1,128], index: 0, kind: input, shape index: {}]
  %s1 = inlined_call_operand.vmem [shape: f32[1,128], index: 1, kind: input, shape index: {}]
  %s2 = inlined_call_operand.vmem [shape: f32[1,128], index: 2, kind: input, shape index: {}]
  %s3 = inlined_call_operand.hbm [shape: f32[8,128], index: 3, kind: input, shape index: {}]
  %s4 = inlined_call_operand.hbm [shape: f32[8,128], index: 4, kind: input, shape index: {}]
  %s5 = inlined_call_operand.hbm [shape: bf16[128,128], index: 5, kind: input, shape index: {}]
  %s6 = inlined_call_operand.hbm [shape: f32[8,128], index: 6, kind: output, shape index: {}]
  %s7 = sld [smem:[#allocation0]]
  $region54: #{tpu_custom_call.1} parent=0
    _
  %s9 = ssub.s32 1, %s7
  %s10 = scalar_select 0, %s9, %s7
  $region1: #{tpu_custom_call.1} parent=0
    #allocation5 [shape = 'u8[512]{0}', space=vmem, size = 0x400, scoped, tag = 'input window, operand 0, single buffered']
    #allocation6 [shape = 's32[1]{0}', space=sflag, size = 0x4, scoped, tag = 'scoped memory for tpu_custom_call.1']
    #allocation7 [shape = 's32[1]{0}', space=sflag, size = 0x4, scoped, tag = 'scoped memory for tpu_custom_call.1']
    #allocation8 [shape = 'u8[4096]{0}', space=vmem, size = 0x1000, scoped, tag = 'input window, operand 3, single buffered']
    #allocation9 [shape = 's32[1]{0}', space=sflag, size = 0x4, scoped, tag = 'scoped memory for tpu_custom_call.1']
    #allocation10 [shape = 'u8[4096]{0}', space=vmem, size = 0x1000, scoped, tag = 'input window, operand 4, single buffered']
    #allocation11 [shape = 'u8[32768]{0}', space=vmem, size = 0x8000, scoped, tag = 'input window, operand 5, single buffered']
    #allocation12 [shape = 's32[1]{0}', space=sflag, size = 0x4, scoped, tag = 'scoped memory for tpu_custom_call.1']
    #allocation13 [shape = 'u8[4096]{0}', space=vmem, size = 0x1000, scoped, tag = 'output window, operand 0, single buffered']
    %11 = vsyncpa [#allocation6], 0
    %12 = vsyncpa [#allocation9], 0
    %13 = vsyncpa [#allocation12], 0
    %14 = vsyncpa [#allocation7], 0
    // Predicated region
    $region2: #{tpu_custom_call.1} parent=1 // pred_check
      _
    $region3: #{tpu_custom_call.1} parent=1 // pred_check_branch
      %16 = sbr.rel (0) target = $region5
    $region4: #{tpu_custom_call.1} parent=1 // pred_region
      %s18 = ssub.s32 16, 16
      %19 = vsyncadd [#allocation6], %s18
      %s21 = sshll.u32 [#allocation5], 4
      %s22 = int_to_ptr.vmem [resolvable:$true] %s21
      %24 = dma.hbm_to_vmem [thread:$0]  %s0, 16, %s22, [#allocation6]
    $region5: #{tpu_custom_call.1} parent=1 // pred_fallthru
      _
    // Predicated region
    $region6: #{tpu_custom_call.1} parent=1 // pred_check
      _
    $region7: #{tpu_custom_call.1} parent=1 // pred_check_branch
      %26 = sbr.rel (0) target = $region9
    $region8: #{tpu_custom_call.1} parent=1 // pred_region
      _
    $region9: #{tpu_custom_call.1} parent=1 // pred_fallthru
      _
    // Predicated region
    $region10: #{tpu_custom_call.1} parent=1 // pred_check
      _
    $region11: #{tpu_custom_call.1} parent=1 // pred_check_branch
      %28 = sbr.rel (0) target = $region13
    $region12: #{tpu_custom_call.1} parent=1 // pred_region
      _
    $region13: #{tpu_custom_call.1} parent=1 // pred_fallthru
      _
    // Predicated region
    $region14: #{tpu_custom_call.1} parent=1 // pred_check
      _
    $region15: #{tpu_custom_call.1} parent=1 // pred_check_branch
      %30 = sbr.rel (0) target = $region17
    $region16: #{tpu_custom_call.1} parent=1 // pred_region
      %s32 = ssub.s32 128, 128
      %33 = vsyncadd [#allocation9], %s32
      %s35 = sshll.u32 [#allocation8], 4
      %s36 = int_to_ptr.vmem [resolvable:$true] %s35
      %38 = dma.hbm_to_vmem [thread:$0]  %s3, 128, %s36, [#allocation9]
    $region17: #{tpu_custom_call.1} parent=1 // pred_fallthru
      _
    // Predicated region
    $region18: #{tpu_custom_call.1} parent=1 // pred_check
      _
    $region19: #{tpu_custom_call.1} parent=1 // pred_check_branch
      %40 = sbr.rel (0) target = $region21
    $region20: #{tpu_custom_call.1} parent=1 // pred_region
      %s42 = ssub.s32 128, 128
      %43 = vsyncadd [#allocation9], %s42
      %s45 = sshll.u32 [#allocation10], 4
      %s46 = int_to_ptr.vmem [resolvable:$true] %s45
      %48 = dma.hbm_to_vmem [thread:$0]  %s4, 128, %s46, [#allocation9]
    $region21: #{tpu_custom_call.1} parent=1 // pred_fallthru
      _
    // Predicated region
    $region22: #{tpu_custom_call.1} parent=1 // pred_check
      _
    $region23: #{tpu_custom_call.1} parent=1 // pred_check_branch
      %50 = sbr.rel (0) target = $region25
    $region24: #{tpu_custom_call.1} parent=1 // pred_region
      %s52 = ssub.s32 1024, 1024
      %53 = vsyncadd [#allocation12], %s52
      %s54 = sshll.u32 [#allocation11], 4
      %s55 = int_to_ptr.vmem [resolvable:$true] %s54
      %60 = dma.hbm_to_vmem [thread:$0]  %s5, 1024, %s55, [#allocation12], 64, 64, 4
    $region25: #{tpu_custom_call.1} parent=1 // pred_fallthru
      _
    // Predicated region
    $region26: #{tpu_custom_call.1} parent=1 // pred_check
      _
    $region27: #{tpu_custom_call.1} parent=1 // pred_check_branch
      %62 = sbr.rel (0) target = $region29
    $region28: #{tpu_custom_call.1} parent=1 // pred_region
      %63 = dma.done [#allocation6], 16
    $region29: #{tpu_custom_call.1} parent=1 // pred_fallthru
      _
    // Predicated region
    $region30: #{tpu_custom_call.1} parent=1 // pred_check
      _
    $region31: #{tpu_custom_call.1} parent=1 // pred_check_branch
      %65 = sbr.rel (0) target = $region33
    $region32: #{tpu_custom_call.1} parent=1 // pred_region
      %66 = dma.done [#allocation9], 128
    $region33: #{tpu_custom_call.1} parent=1 // pred_fallthru
      _
    // Predicated region
    $region34: #{tpu_custom_call.1} parent=1 // pred_check
      _
    $region35: #{tpu_custom_call.1} parent=1 // pred_check_branch
      %68 = sbr.rel (0) target = $region37
    $region36: #{tpu_custom_call.1} parent=1 // pred_region
      %69 = dma.done [#allocation9], 128
    $region37: #{tpu_custom_call.1} parent=1 // pred_fallthru
      _
    // Predicated region
    $region38: #{tpu_custom_call.1} parent=1 // pred_check
      _
    $region39: #{tpu_custom_call.1} parent=1 // pred_check_branch
      %71 = sbr.rel (0) target = $region41
    $region40: #{tpu_custom_call.1} parent=1 // pred_region
      %72 = dma.done [#allocation12], 1024
    $region41: #{tpu_custom_call.1} parent=1 // pred_fallthru
      _
    %p74 = scmp.eq.s32.totalorder 0, 0
    // Predicated region
    $region42: #{tpu_custom_call.1} parent=1 // pred_check
      %p75 = pneg %p74
    $region43: #{tpu_custom_call.1} parent=1 // pred_check_branch
      %77 = sbr.rel (%p75) target = $region45
    $region44: #{tpu_custom_call.1} parent=1 // pred_region
      %vm78 = vcmask 7168
      %79 = vst.msk [vmem:[#allocation2] sm:$0xff] %vm78, 0.0
      %80 = vst.msk [vmem:[#allocation3] sm:$0xff] %vm78, 0.0
      %81 = vst.msk [vmem:[#allocation4] sm:$0xff] %vm78, 0.0
    $region45: #{tpu_custom_call.1} parent=1 // pred_fallthru
      _
    %v82 = vld [vmem:[#allocation5] sm:$0x1]
    %v83 = vld [vmem:[%s1] sm:$0x1]
    %v84 = vld [vmem:[%s2] sm:$0x1]
    %v85 = vld [vmem:[#allocation8] sm:$0xff]
    %v86 = vld [vmem:[#allocation10] sm:$0xff]
    %v87 = vld [vmem:[#allocation11] sm:$0xf]
    %v88 = vld [vmem:[#allocation11 + $0x4] sm:$0xf]
    %v89 = vld [vmem:[#allocation11 + $0x8] sm:$0xf]
    %v90 = vld [vmem:[#allocation11 + $0xc] sm:$0xf]
    %v91 = vld [vmem:[#allocation11 + $0x10] sm:$0xf]
    %v92 = vld [vmem:[#allocation11 + $0x14] sm:$0xf]
    %v93 = vld [vmem:[#allocation11 + $0x18] sm:$0xf]
    %v94 = vld [vmem:[#allocation11 + $0x1c] sm:$0xf]
    %v95 = vld [vmem:[#allocation11 + $0x20] sm:$0xf]
    %v96 = vld [vmem:[#allocation11 + $0x24] sm:$0xf]
    %v97 = vld [vmem:[#allocation11 + $0x28] sm:$0xf]
    %v98 = vld [vmem:[#allocation11 + $0x2c] sm:$0xf]
    %v99 = vld [vmem:[#allocation11 + $0x30] sm:$0xf]
    %v100 = vld [vmem:[#allocation11 + $0x34] sm:$0xf]
    %v101 = vld [vmem:[#allocation11 + $0x38] sm:$0xf]
    %v102 = vld [vmem:[#allocation11 + $0x3c] sm:$0xf]
    %v104 = vlaneseq
    %v105 = vshrl.u32 %v104, 7
    %v106 = vsub.s32 0, %v105
    %v107 = vrot.slane %v82, %v106
    %110 = vset.pattern.permute.xlu0 0
    %111 = vperm.xlu0 %110, %v86
    %v112 = vpop.permute.xlu0 %111
    %v114 = vmul.f32 %v107, %v112
    %v115 = vsub.f32 0.0, %v114
    %v116 = vmul.f32 %v115, 1.442695
    %v117 = vpow.pop %v116
    %v118 = vmul.f32 %v114, 1.442695
    %v119 = vpow.pop %v118
    %v121 = vlaneseq
    %v122 = vshrl.u32 %v121, 7
    %v123 = vsub.s32 0, %v122
    %v124 = vrot.slane %v84, %v123
    %v126 = vmul.f32 %v119, %v124
    %v127 = vpack.c.bf16 %v126, %v126
    %v128 = vunpack.c.l.bf16 %v127
    %v129 = vsub.f32 %v126, %v128
    %v130 = vpack.c.bf16 %v129, %v129
    %v147 = vunpack.c.l.b16 %v87
    %v148 = vunpack.c.l.b16 %v88
    %v149 = vunpack.c.l.b16 %v89
    %v150 = vunpack.c.l.b16 %v90
    %v151 = vunpack.c.l.b16 %v91
    %v152 = vunpack.c.l.b16 %v92
    %v153 = vunpack.c.l.b16 %v93
    %v154 = vunpack.c.l.b16 %v94
    %v155 = vunpack.c.l.b16 %v95
    %v156 = vunpack.c.l.b16 %v96
    %v157 = vunpack.c.l.b16 %v97
    %v158 = vunpack.c.l.b16 %v98
    %v159 = vunpack.c.l.b16 %v99
    %v160 = vunpack.c.l.b16 %v100
    %v161 = vunpack.c.l.b16 %v101
    %v162 = vunpack.c.l.b16 %v102
    %v163 = vpack.c.b16 %v148, %v147
    %v164 = vpack.c.b16 %v150, %v149
    %v165 = vpack.c.b16 %v152, %v151
    %v166 = vpack.c.b16 %v154, %v153
    %v167 = vpack.c.b16 %v156, %v155
    %v168 = vpack.c.b16 %v158, %v157
    %v169 = vpack.c.b16 %v160, %v159
    %v170 = vpack.c.b16 %v162, %v161
    %179 = vmatprep.subr.bf16.mxu0 0
    %180 = vmatpush1.bf16.msra.mxu0 %v170
    %181 = vmatprep.subr.bf16.mxu0 0
    %182 = vmatpush1.bf16.msra.mxu0 %v169
    %183 = vmatprep.subr.bf16.mxu0 0
    %184 = vmatpush1.bf16.msra.mxu0 %v168
    %185 = vmatprep.subr.bf16.mxu0 0
    %186 = vmatpush1.bf16.msra.mxu0 %v167
    %187 = vmatprep.subr.bf16.mxu0 0
    %188 = vmatpush1.bf16.msra.mxu0 %v166
    %189 = vmatprep.subr.bf16.mxu0 0
    %190 = vmatpush1.bf16.msra.mxu0 %v165
    %191 = vmatprep.subr.bf16.mxu0 0
    %192 = vmatpush1.bf16.msra.mxu0 %v164
    %193 = vmatprep.subr.bf16.mxu0 0
    %194 = vmatpush1.bf16.msra.mxu0 %v163
    %195 = vmatprep.subr.bf16.mxu0 0
    %196 = vmatpush2.bf16.msra.mxu0 0
    %197 = vmatprep.subr.bf16.mxu0 0
    %198 = vmatpush2.bf16.msra.mxu0 0
    %199 = vmatprep.subr.bf16.mxu0 0
    %200 = vmatpush2.bf16.msra.mxu0 0
    %201 = vmatprep.subr.bf16.mxu0 0
    %202 = vmatpush2.bf16.msra.mxu0 0
    %203 = vmatprep.subr.bf16.mxu0 0
    %204 = vmatpush2.bf16.msra.mxu0 0
    %205 = vmatprep.subr.bf16.mxu0 0
    %206 = vmatpush2.bf16.msra.mxu0 0
    %207 = vmatprep.subr.bf16.mxu0 0
    %208 = vmatpush2.bf16.msra.mxu0 0
    %209 = vmatprep.subr.bf16.mxu0 0
    %210 = vmatpush2.bf16.msra.mxu0 0
    %211 = vmatprep.mubr.bf16.mxu0 0
    %212 = vmatmul.mubr.bf16.gmra.mxu0 %v130
    %v213 = vpop.f32.mrf.mxu0
    %v214 = vadd.f32 0.0, %v213
    %v215 = vpop.f32.mrf.mxu0
    %v216 = vpop.f32.mrf.mxu0
    %v217 = vpop.f32.mrf.mxu0
    %218 = vdwg.mxu0
    %219 = vmatprep.subr.bf16.mxu0 0
    %220 = vmatpush1.bf16.msra.mxu0 %v170
    %221 = vmatprep.subr.bf16.mxu0 0
    %222 = vmatpush1.bf16.msra.mxu0 %v169
    %223 = vmatprep.subr.bf16.mxu0 0
    %224 = vmatpush1.bf16.msra.mxu0 %v168
    %225 = vmatprep.subr.bf16.mxu0 0
    %226 = vmatpush1.bf16.msra.mxu0 %v167
    %227 = vmatprep.subr.bf16.mxu0 0
    %228 = vmatpush1.bf16.msra.mxu0 %v166
    %229 = vmatprep.subr.bf16.mxu0 0
    %230 = vmatpush1.bf16.msra.mxu0 %v165
    %231 = vmatprep.subr.bf16.mxu0 0
    %232 = vmatpush1.bf16.msra.mxu0 %v164
    %233 = vmatprep.subr.bf16.mxu0 0
    %234 = vmatpush1.bf16.msra.mxu0 %v163
    %235 = vmatprep.subr.bf16.mxu0 0
    %236 = vmatpush2.bf16.msra.mxu0 0
    %237 = vmatprep.subr.bf16.mxu0 0
    %238 = vmatpush2.bf16.msra.mxu0 0
    %239 = vmatprep.subr.bf16.mxu0 0
    %240 = vmatpush2.bf16.msra.mxu0 0
    %241 = vmatprep.subr.bf16.mxu0 0
    %242 = vmatpush2.bf16.msra.mxu0 0
    %243 = vmatprep.subr.bf16.mxu0 0
    %244 = vmatpush2.bf16.msra.mxu0 0
    %245 = vmatprep.subr.bf16.mxu0 0
    %246 = vmatpush2.bf16.msra.mxu0 0
    %247 = vmatprep.subr.bf16.mxu0 0
    %248 = vmatpush2.bf16.msra.mxu0 0
    %249 = vmatprep.subr.bf16.mxu0 0
    %250 = vmatpush2.bf16.msra.mxu0 0
    %251 = vmatprep.mubr.bf16.mxu0 0
    %252 = vmatmul.mubr.bf16.gmra.mxu0 %v127
    %v253 = vpop.f32.mrf.mxu0
    %v254 = vadd.f32 %v214, %v253
    %v255 = vpop.f32.mrf.mxu0
    %v256 = vpop.f32.mrf.mxu0
    %v257 = vpop.f32.mrf.mxu0
    %258 = vdwg.mxu0
    %v259 = vld [vmem:[#allocation2] sm:$0xff]
    %261 = vset.pattern.permute.xlu0 0
    %262 = vperm.xlu0 %261, %v259
    %v263 = vpop.permute.xlu0 %262
    %v265 = vadd.f32 %v254, %v263
    %v266 = vmul.f32 %v119, %v85
    %v267 = vpack.c.bf16 %v266, %v266
    %v268 = vunpack.c.l.bf16 %v267
    %v269 = vsub.f32 %v266, %v268
    %v270 = vpack.c.bf16 %v269, %v269
    %271 = vmatprep.subr.bf16.mxu0 0
    %272 = vmatpush1.bf16.msra.mxu0 %v170
    %273 = vmatprep.subr.bf16.mxu0 0
    %274 = vmatpush1.bf16.msra.mxu0 %v169
    %275 = vmatprep.subr.bf16.mxu0 0
    %276 = vmatpush1.bf16.msra.mxu0 %v168
    %277 = vmatprep.subr.bf16.mxu0 0
    %278 = vmatpush1.bf16.msra.mxu0 %v167
    %279 = vmatprep.subr.bf16.mxu0 0
    %280 = vmatpush1.bf16.msra.mxu0 %v166
    %281 = vmatprep.subr.bf16.mxu0 0
    %282 = vmatpush1.bf16.msra.mxu0 %v165
    %283 = vmatprep.subr.bf16.mxu0 0
    %284 = vmatpush1.bf16.msra.mxu0 %v164
    %285 = vmatprep.subr.bf16.mxu0 0
    %286 = vmatpush1.bf16.msra.mxu0 %v163
    %287 = vmatprep.subr.bf16.mxu0 0
    %288 = vmatpush2.bf16.msra.mxu0 0
    %289 = vmatprep.subr.bf16.mxu0 0
    %290 = vmatpush2.bf16.msra.mxu0 0
    %291 = vmatprep.subr.bf16.mxu0 0
    %292 = vmatpush2.bf16.msra.mxu0 0
    %293 = vmatprep.subr.bf16.mxu0 0
    %294 = vmatpush2.bf16.msra.mxu0 0
    %295 = vmatprep.subr.bf16.mxu0 0
    %296 = vmatpush2.bf16.msra.mxu0 0
    %297 = vmatprep.subr.bf16.mxu0 0
    %298 = vmatpush2.bf16.msra.mxu0 0
    %299 = vmatprep.subr.bf16.mxu0 0
    %300 = vmatpush2.bf16.msra.mxu0 0
    %301 = vmatprep.subr.bf16.mxu0 0
    %302 = vmatpush2.bf16.msra.mxu0 0
    %303 = vmatprep.mubr.bf16.mxu0 0
    %304 = vmatmul.mubr.bf16.gmra.mxu0 %v270
    %v305 = vpop.f32.mrf.mxu0
    %v306 = vadd.f32 0.0, %v305
    %v307 = vpop.f32.mrf.mxu0
    %v308 = vpop.f32.mrf.mxu0
    %v309 = vpop.f32.mrf.mxu0
    %310 = vdwg.mxu0
    %311 = vmatprep.subr.bf16.mxu0 0
    %312 = vmatpush1.bf16.msra.mxu0 %v170
    %313 = vmatprep.subr.bf16.mxu0 0
    %314 = vmatpush1.bf16.msra.mxu0 %v169
    %315 = vmatprep.subr.bf16.mxu0 0
    %316 = vmatpush1.bf16.msra.mxu0 %v168
    %317 = vmatprep.subr.bf16.mxu0 0
    %318 = vmatpush1.bf16.msra.mxu0 %v167
    %319 = vmatprep.subr.bf16.mxu0 0
    %320 = vmatpush1.bf16.msra.mxu0 %v166
    %321 = vmatprep.subr.bf16.mxu0 0
    %322 = vmatpush1.bf16.msra.mxu0 %v165
    %323 = vmatprep.subr.bf16.mxu0 0
    %324 = vmatpush1.bf16.msra.mxu0 %v164
    %325 = vmatprep.subr.bf16.mxu0 0
    %326 = vmatpush1.bf16.msra.mxu0 %v163
    %327 = vmatprep.subr.bf16.mxu0 0
    %328 = vmatpush2.bf16.msra.mxu0 0
    %329 = vmatprep.subr.bf16.mxu0 0
    %330 = vmatpush2.bf16.msra.mxu0 0
    %331 = vmatprep.subr.bf16.mxu0 0
    %332 = vmatpush2.bf16.msra.mxu0 0
    %333 = vmatprep.subr.bf16.mxu0 0
    %334 = vmatpush2.bf16.msra.mxu0 0
    %335 = vmatprep.subr.bf16.mxu0 0
    %336 = vmatpush2.bf16.msra.mxu0 0
    %337 = vmatprep.subr.bf16.mxu0 0
    %338 = vmatpush2.bf16.msra.mxu0 0
    %339 = vmatprep.subr.bf16.mxu0 0
    %340 = vmatpush2.bf16.msra.mxu0 0
    %341 = vmatprep.subr.bf16.mxu0 0
    %342 = vmatpush2.bf16.msra.mxu0 0
    %343 = vmatprep.mubr.bf16.mxu0 0
    %344 = vmatmul.mubr.bf16.gmra.mxu0 %v267
    %v345 = vpop.f32.mrf.mxu0
    %v346 = vadd.f32 %v306, %v345
    %v347 = vpop.f32.mrf.mxu0
    %v348 = vpop.f32.mrf.mxu0
    %v349 = vpop.f32.mrf.mxu0
    %350 = vdwg.mxu0
    %v351 = vld [vmem:[#allocation3] sm:$0xff]
    %353 = vset.pattern.permute.xlu0 0
    %354 = vperm.xlu0 %353, %v351
    %v355 = vpop.permute.xlu0 %354
    %v357 = vadd.f32 %v346, %v355
    %358 = vset.pattern.permute.xlu0 2
    %359 = vperm.xlu0 %358, %v86
    %v360 = vpop.permute.xlu0 %359
    %v362 = vmul.f32 %v360, %v117
    %v363 = vmul.f32 %v362, %v265
    %v364 = vlaneseq
    %v365 = vand.u32 %v364, 127
    %366 = vrot.lane.b32.xlu0 %v363, 1
    %v367 = vpop.permute.xlu0 %366
    %vm368 = vcmp.eq.s32.totalorder %v365, 0
    %v369 = vld [vmem:[#allocation4] sm:$0xff]
    %371 = vset.pattern.permute.xlu0 0
    %372 = vperm.xlu0 %371, %v369
    %v373 = vpop.permute.xlu0 %372
    %v375 = vsel %vm368, %v373, %v367
    %376 = vset.pattern.permute.xlu0 1
    %377 = vperm.xlu0 %376, %v86
    %v378 = vpop.permute.xlu0 %377
    %v380 = vmul.f32 %v378, %v357
    %381 = vset.pattern.permute.xlu0 3
    %382 = vperm.xlu0 %381, %v86
    %v383 = vpop.permute.xlu0 %382
    %v385 = vsub.f32 %v383, %v380
    %v386 = vmul.f32 %v117, %v385
    %v388 = vlaneseq
    %v389 = vshrl.u32 %v388, 7
    %v390 = vsub.s32 0, %v389
    %v391 = vrot.slane %v83, %v390
    %v393 = vmul.f32 %v375, %v391
    %v394 = vadd.f32 %v386, %v393
    %395 = vst [vmem:[#allocation13] sm:$0xff] %v394
    %397 = vrot.lane.b32.xlu0 %v265, 1
    %v398 = vpop.permute.xlu0 %397
    %vm400 = vcmask 7168
    %401 = vst.msk [vmem:[#allocation2] sm:$0xff] %vm400, %v398
    %403 = vrot.lane.b32.xlu0 %v357, 1
    %v404 = vpop.permute.xlu0 %403
    %406 = vst.msk [vmem:[#allocation3] sm:$0xff] %vm400, %v404
    %408 = vrot.lane.b32.xlu0 %v363, 1
    %v409 = vpop.permute.xlu0 %408
    %411 = vst.msk [vmem:[#allocation4] sm:$0xff] %vm400, %v409
    // Predicated region
    $region46: #{tpu_custom_call.1} parent=1 // pred_check
      _
    $region47: #{tpu_custom_call.1} parent=1 // pred_check_branch
      %413 = sbr.rel (0) target = $region49
    $region48: #{tpu_custom_call.1} parent=1 // pred_region
      %s415 = ssub.s32 128, 128
      %416 = vsyncadd [#allocation7], %s415
      %s418 = sshll.u32 [#allocation13], 4
      %s419 = int_to_ptr.vmem [resolvable:$true] %s418
      %421 = dma.vmem_to_hbm [thread:$0]  %s419, 128, %s6, [#allocation7]
    $region49: #{tpu_custom_call.1} parent=1 // pred_fallthru
      _
    // Predicated region
    $region50: #{tpu_custom_call.1} parent=1 // pred_check
      _
    $region51: #{tpu_custom_call.1} parent=1 // pred_check_branch
      %423 = sbr.rel (0) target = $region53
    $region52: #{tpu_custom_call.1} parent=1 // pred_region
      %424 = dma.done [#allocation7], 128
    $region53: #{tpu_custom_call.1} parent=1 // pred_fallthru
      _
    %425 = vsyncpa [#allocation6], 1
    %426 = vsyncpa [#allocation9], 1
    %427 = vsyncpa [#allocation12], 1
    %428 = vsyncpa [#allocation7], 1

</llo_original>
